<compile_context>
chip_gen: v5e
topology: v5e:2x2
jax: 0.10.0
libtpu: 0.0.40
codegen_flags: <defaults>
</compile_context>

<pallas_src>
import math
import jax
import jax.numpy as jnp
from jax.experimental import pallas as pl
from jax.experimental.pallas import tpu as pltpu

DIM = 12
FFN_DIM = 36
SUBLANE = 8         # f32 sublane width


def _round_up(x, m):
    return ((x + m - 1) // m) * m


def _cdiv(a, b):
    return -(-a // b)


def ffn_kernel(x_ref, w1_ref, b1_ref, w2_ref, b2_ref, o_ref):
    # Everything is f32; no per-step dtype conversions.
    x = x_ref[...]                                   # [TM, D]

    # fc1: [TM, D] @ [D, F] + [1, F]
    h = jnp.dot(x, w1_ref[...],
                preferred_element_type=jnp.float32) + b1_ref[...]

    # exact (erf-based) GELU, matching nn.GELU() default
    h = 0.5 * h * (1.0 + jax.lax.erf(h * (1.0 / math.sqrt(2.0))))

    # dropout: identity (eval mode)

    # fc2: [TM, F] @ [F, D] + [1, D]
    o = jnp.dot(h, w2_ref[...],
                preferred_element_type=jnp.float32) + b2_ref[...]

    o_ref[...] = o.astype(o_ref.dtype)


def feed_forward(x, w1, b1, w2, b2, *, tm=2048):
    """x: [B, T, D]; w1: [D, F]; b1: [1, F]; w2: [F, D]; b2: [1, D]."""
    B, T, D = x.shape
    F = w1.shape[1]
    M = B * T

    # Pad M only to the sublane multiple; split into near-equal 8-aligned tiles
    # so total padding never exceeds 8 rows per block (no round-up to a big TM).
    M8 = _round_up(M, SUBLANE)
    num_blocks = max(1, _cdiv(M8, tm))
    TM = _round_up(_cdiv(M8, num_blocks), SUBLANE)
    M_pad = TM * num_blocks

    x2 = x.reshape(M, D)
    if M_pad != M:
        x2 = jnp.pad(x2, ((0, M_pad - M), (0, 0)))

    grid = (num_blocks,)

    out2 = pl.pallas_call(
        ffn_kernel,
        out_shape=jax.ShapeDtypeStruct((M_pad, D), x.dtype),
        grid=grid,
        in_specs=[
            pl.BlockSpec((TM, D), lambda i: (i, 0)),   # x tile (pipelined)
            pl.BlockSpec((D, F), lambda i: (0, 0)),    # w1 (VMEM-resident)
            pl.BlockSpec((1, F), lambda i: (0, 0)),    # b1 (VMEM-resident)
            pl.BlockSpec((F, D), lambda i: (0, 0)),    # w2 (VMEM-resident)
            pl.BlockSpec((1, D), lambda i: (0, 0)),    # b2 (VMEM-resident)
        ],
        out_specs=pl.BlockSpec((TM, D), lambda i: (i, 0)),
        compiler_params=pltpu.CompilerParams(
            dimension_semantics=("parallel",)),
        cost_estimate=pl.CostEstimate(
            flops=4 * M_pad * D * F,                   # two matmuls
            transcendentals=M_pad * F,                 # erf per fc1 activation
            bytes_accessed=4 * (2 * M_pad * D          # x in + out
                                + 2 * D * F            # weights
                                + F + D),              # biases
        ),
    )(x2, w1, b1, w2, b2)

    if M_pad != M:
        out2 = out2[:M]
    return out2.reshape(B, T, D)


def init_params(key, dim, ffn_dim):
    """Deterministic init mimicking nn.Linear's U(-1/sqrt(fan_in), 1/sqrt(fan_in))."""
    k1, k2, k3, k4 = jax.random.split(key, 4)
    bound1 = 1.0 / math.sqrt(dim)
    bound2 = 1.0 / math.sqrt(ffn_dim)
    # stored as [in, out] (already transposed relative to PyTorch)
    w1 = jax.random.uniform(k1, (dim, ffn_dim), jnp.float32, -bound1, bound1)
    b1 = jax.random.uniform(k2, (1, ffn_dim), jnp.float32, -bound1, bound1)
    w2 = jax.random.uniform(k3, (ffn_dim, dim), jnp.float32, -bound2, bound2)
    b2 = jax.random.uniform(k4, (1, dim), jnp.float32, -bound2, bound2)
    return w1, b1, w2, b2


if __name__ == "__main__":
    key = jax.random.PRNGKey(0)
    kx, kp = jax.random.split(key)

    B, T = 2, 8
    x = jax.random.normal(kx, (B, T, DIM), jnp.float32)
    w1, b1, w2, b2 = init_params(kp, DIM, FFN_DIM)

    out = feed_forward(x, w1, b1, w2, b2)
    jax.block_until_ready(out)

    # pure-JAX reference check (exact erf GELU, eval-mode dropout)
    ref = jax.nn.gelu(x @ w1 + b1[0], approximate=False) @ w2 + b2[0]
    assert out.shape == (B, T, DIM)
    assert jnp.allclose(out, ref, atol=1e-5, rtol=1e-5)

    print("KERNEL_OK")
</pallas_src>

<mosaic_0001>
module attributes {stable_mosaic.version = 11 : i64} {
  func.func @ffn_kernel(%arg0: i32, %arg1: memref<16x12xf32, #tpu.memory_space<vmem>>, %arg2: memref<12x36xf32, #tpu.memory_space<vmem>>, %arg3: memref<1x36xf32, #tpu.memory_space<vmem>>, %arg4: memref<36x12xf32, #tpu.memory_space<vmem>>, %arg5: memref<1x12xf32, #tpu.memory_space<vmem>>, %arg6: memref<16x12xf32, #tpu.memory_space<vmem>>) attributes {dimension_semantics = [#tpu.dimension_semantics<parallel>], iteration_bounds = array<i64: 1>, scalar_prefetch = 0 : i64, scratch_operands = 0 : i64, tpu.core_type = #tpu.core_type<tc>, window_params = [{transform_indices = @transform_0, window_bounds = array<i64: 16, 12>}, {pipeline_mode = #tpu.pipeline_mode<synchronous>, transform_indices = @transform_1, window_bounds = array<i64: 12, 36>}, {pipeline_mode = #tpu.pipeline_mode<synchronous>, transform_indices = @transform_2, window_bounds = array<i64: 1, 36>}, {pipeline_mode = #tpu.pipeline_mode<synchronous>, transform_indices = @transform_3, window_bounds = array<i64: 36, 12>}, {pipeline_mode = #tpu.pipeline_mode<synchronous>, transform_indices = @transform_4, window_bounds = array<i64: 1, 12>}, {transform_indices = @transform_5, window_bounds = array<i64: 16, 12>}]} {
    %c0 = arith.constant 0 : index
    %c0_0 = arith.constant 0 : index
    %0 = vector.load %arg1[%c0, %c0_0] : memref<16x12xf32, #tpu.memory_space<vmem>>, vector<16x12xf32>
    %c0_1 = arith.constant 0 : index
    %c0_2 = arith.constant 0 : index
    %1 = vector.load %arg2[%c0_1, %c0_2] : memref<12x36xf32, #tpu.memory_space<vmem>>, vector<12x36xf32>
    %cst = arith.constant dense<0.000000e+00> : vector<16x36xf32>
    %2 = tpu.matmul %0, %1, %cst {dimension_numbers = #tpu.dot_dimension_numbers<[1], [0], [0], [1], [0, 0, 1, 1], [], []>} : vector<16x12xf32>, vector<12x36xf32>, vector<16x36xf32> -> vector<16x36xf32>
    %c0_3 = arith.constant 0 : index
    %c0_4 = arith.constant 0 : index
    %3 = vector.load %arg3[%c0_3, %c0_4] : memref<1x36xf32, #tpu.memory_space<vmem>>, vector<1x36xf32>
    %4 = vector.broadcast %3 : vector<1x36xf32> to vector<16x36xf32>
    %5 = arith.addf %2, %4 : vector<16x36xf32>
    %cst_5 = arith.constant 5.000000e-01 : f32
    %6 = vector.broadcast %cst_5 : f32 to vector<16x36xf32>
    %7 = arith.mulf %6, %5 : vector<16x36xf32>
    %cst_6 = arith.constant 0.707106769 : f32
    %8 = vector.broadcast %cst_6 : f32 to vector<16x36xf32>
    %9 = arith.mulf %5, %8 : vector<16x36xf32>
    %10 = math.erf %9 : vector<16x36xf32>
    %cst_7 = arith.constant 1.000000e+00 : f32
    %11 = vector.broadcast %cst_7 : f32 to vector<16x36xf32>
    %12 = arith.addf %11, %10 : vector<16x36xf32>
    %13 = arith.mulf %7, %12 : vector<16x36xf32>
    %c0_8 = arith.constant 0 : index
    %c0_9 = arith.constant 0 : index
    %14 = vector.load %arg4[%c0_8, %c0_9] : memref<36x12xf32, #tpu.memory_space<vmem>>, vector<36x12xf32>
    %cst_10 = arith.constant dense<0.000000e+00> : vector<16x12xf32>
    %15 = tpu.matmul %13, %14, %cst_10 {dimension_numbers = #tpu.dot_dimension_numbers<[1], [0], [0], [1], [0, 0, 1, 1], [], []>} : vector<16x36xf32>, vector<36x12xf32>, vector<16x12xf32> -> vector<16x12xf32>
    %c0_11 = arith.constant 0 : index
    %c0_12 = arith.constant 0 : index
    %16 = vector.load %arg5[%c0_11, %c0_12] : memref<1x12xf32, #tpu.memory_space<vmem>>, vector<1x12xf32>
    %17 = vector.broadcast %16 : vector<1x12xf32> to vector<16x12xf32>
    %18 = arith.addf %15, %17 : vector<16x12xf32>
    %c0_13 = arith.constant 0 : index
    %c0_14 = arith.constant 0 : index
    %19 = vector.load %arg6[%c0_13, %c0_14] : memref<16x12xf32, #tpu.memory_space<vmem>>, vector<16x12xf32>
    tpu.vector_store %arg6[%c0_13, %c0_14], %18 {strides = array<i32>} : memref<16x12xf32, #tpu.memory_space<vmem>>, vector<16x12xf32>,
    return
  }
  func.func @transform_0(%arg0: i32) -> (i32, i32) {
    %c0_i32 = arith.constant 0 : i32
    %c0_i32_0 = arith.constant 0 : i32
    return %arg0, %c0_i32 : i32, i32
  }
  func.func @transform_1(%arg0: i32) -> (i32, i32) {
    %c0_i32 = arith.constant 0 : i32
    %c0_i32_0 = arith.constant 0 : i32
    %c0_i32_1 = arith.constant 0 : i32
    return %c0_i32, %c0_i32_0 : i32, i32
  }
  func.func @transform_2(%arg0: i32) -> (i32, i32) {
    %c0_i32 = arith.constant 0 : i32
    %c0_i32_0 = arith.constant 0 : i32
    %c0_i32_1 = arith.constant 0 : i32
    return %c0_i32, %c0_i32_0 : i32, i32
  }
  func.func @transform_3(%arg0: i32) -> (i32, i32) {
    %c0_i32 = arith.constant 0 : i32
    %c0_i32_0 = arith.constant 0 : i32
    %c0_i32_1 = arith.constant 0 : i32
    return %c0_i32, %c0_i32_0 : i32, i32
  }
  func.func @transform_4(%arg0: i32) -> (i32, i32) {
    %c0_i32 = arith.constant 0 : i32
    %c0_i32_0 = arith.constant 0 : i32
    %c0_i32_1 = arith.constant 0 : i32
    return %c0_i32, %c0_i32_0 : i32, i32
  }
  func.func @transform_5(%arg0: i32) -> (i32, i32) {
    %c0_i32 = arith.constant 0 : i32
    %c0_i32_0 = arith.constant 0 : i32
    return %arg0, %c0_i32 : i32, i32
  }
}

</mosaic_0001>

<llo_original>
// kernel: tpu_custom_call.1
$region0: #{tpu_custom_call.1}
  #allocation0 [shape = 'u32[]', space=smem, size = 0x4, offset = 0x4, fixed_abs, tag = 'smem constant byte address 0x4 - core index']
  #allocation1 [shape = 'u32[72,128]{1,0:T(1,128)}', space=vmem, size = 0x9000, scoped, tag = 'internal scratch']
  %s0 = inlined_call_operand.vmem [shape: f32[16,12], index: 0, kind: input, shape index: {}]
  %s1 = inlined_call_operand.vmem [shape: f32[12,36], index: 1, kind: input, shape index: {}]
  %s2 = inlined_call_operand.vmem [shape: f32[1,36], index: 2, kind: input, shape index: {}]
  %s3 = inlined_call_operand.vmem [shape: f32[36,12], index: 3, kind: input, shape index: {}]
  %s4 = inlined_call_operand.vmem [shape: f32[1,12], index: 4, kind: input, shape index: {}]
  %s5 = inlined_call_operand.hbm [shape: f32[16,12], index: 5, kind: output, shape index: {}]
  %s6 = sld [smem:[#allocation0]]
  $region30: #{tpu_custom_call.1} parent=0
    _
  %s8 = ssub.s32 1, %s6
  %s9 = scalar_select 0, %s8, %s6
  $region1: #{tpu_custom_call.1} parent=0
    #allocation2 [shape = 'u8[8192]{0}', space=vmem, size = 0x2000, scoped, tag = 'output window, operand 0, single buffered']
    #allocation3 [shape = 's32[1]{0}', space=sflag, size = 0x4, scoped, tag = 'scoped memory for tpu_custom_call.1']
    %10 = vsyncpa [#allocation3], 0
    // Predicated region
    $region2: #{tpu_custom_call.1} parent=1 // pred_check
      _
    $region3: #{tpu_custom_call.1} parent=1 // pred_check_branch
      %12 = sbr.rel (0) target = $region5
    $region4: #{tpu_custom_call.1} parent=1 // pred_region
      _
    $region5: #{tpu_custom_call.1} parent=1 // pred_fallthru
      _
    // Predicated region
    $region6: #{tpu_custom_call.1} parent=1 // pred_check
      _
    $region7: #{tpu_custom_call.1} parent=1 // pred_check_branch
      %14 = sbr.rel (0) target = $region9
    $region8: #{tpu_custom_call.1} parent=1 // pred_region
      _
    $region9: #{tpu_custom_call.1} parent=1 // pred_fallthru
      _
    // Predicated region
    $region10: #{tpu_custom_call.1} parent=1 // pred_check
      _
    $region11: #{tpu_custom_call.1} parent=1 // pred_check_branch
      %16 = sbr.rel (0) target = $region13
    $region12: #{tpu_custom_call.1} parent=1 // pred_region
      _
    $region13: #{tpu_custom_call.1} parent=1 // pred_fallthru
      _
    // Predicated region
    $region14: #{tpu_custom_call.1} parent=1 // pred_check
      _
    $region15: #{tpu_custom_call.1} parent=1 // pred_check_branch
      %18 = sbr.rel (0) target = $region17
    $region16: #{tpu_custom_call.1} parent=1 // pred_region
      _
    $region17: #{tpu_custom_call.1} parent=1 // pred_fallthru
      _
    // Predicated region
    $region18: #{tpu_custom_call.1} parent=1 // pred_check
      _
    $region19: #{tpu_custom_call.1} parent=1 // pred_check_branch
      %20 = sbr.rel (0) target = $region21
    $region20: #{tpu_custom_call.1} parent=1 // pred_region
      _
    $region21: #{tpu_custom_call.1} parent=1 // pred_fallthru
      _
    %v21 = vld [vmem:[%s0] sm:$0xff]
    %v22 = vld [vmem:[%s0 + $0x8] sm:$0xff]
    %v23 = vld [vmem:[%s1] sm:$0xff]
    %v24 = vld [vmem:[%s1 + $0x8] sm:$0xf]
    %v25 = vld [vmem:[%s2] sm:$0x1]
    %v27 = vperm.slane %v25, 0
    %vm29 = vcmask 97280
    %v31 = vsel %vm29, %v21, 0
    %v34 = vsel %vm29, %v22, 0
    %vm36 = vcmask 1043456
    %v38 = vsel %vm36, %v24, 0
    %40 = vmatpush.msra.mxu0 0.0
    %41 = vmatpush.msra.mxu0 0.0
    %42 = vmatpush.msra.mxu0 0.0
    %43 = vmatpush.msra.mxu0 0.0
    %44 = vmatpush.msra.mxu0 0.0
    %45 = vmatpush.msra.mxu0 0.0
    %46 = vmatpush.msra.mxu0 0.0
    %47 = vmatpush.msra.mxu0 0.0
    %48 = vmatpush.msra.mxu0 0.0
    %49 = vmatpush.msra.mxu0 0.0
    %50 = vmatpush.msra.mxu0 0.0
    %51 = vmatpush.msra.mxu0 0.0
    %52 = vmatpush.msra.mxu0 0.0
    %53 = vmatpush.msra.mxu0 0.0
    %54 = vmatpush.msra.mxu0 %v38
    %55 = vmatpush.msra.mxu0 %v23
    %56 = vmatmul.f32.gmra.mxu0 %v31
    %v57 = vpop.f32.mrf.mxu0
    %v58 = vadd.f32 %v27, %v57
    %59 = vmatmul.f32.gmra.mxu0 %v34
    %v60 = vpop.f32.mrf.mxu0
    %v61 = vadd.f32 %v27, %v60
    %62 = vdwg.mxu0
    %v63 = vmul.f32 %v58, 0.5
    %v64 = vmul.f32 %v61, 0.5
    %v65 = vmul.f32 %v58, 0.70710677
    %v66 = vmul.f32 %v61, 0.70710677
    %v67 = vmul.f32 %v65, %v65
    %v68 = vmin.f32 16.0, %v67
    %v69 = vmul.f32 %v68, 2.1237322e-06
    %v70 = vadd.f32 %v69, 0.00028619796
    %v71 = vmul.f32 %v68, %v70
    %v72 = vadd.f32 %v71, 0.0036580483
    %v73 = vmul.f32 %v68, %v72
    %v74 = vadd.f32 %v73, 0.05243302
    %v75 = vmul.f32 %v68, %v74
    %v76 = vadd.f32 %v75, 0.18741608
    %v77 = vmul.f32 %v68, %v76
    %v78 = vadd.f32 %v77, 1.1283791
    %v79 = vmul.f32 %v65, %v78
    %v80 = vmul.f32 %v68, 3.8918573e-05
    %v81 = vadd.f32 %v80, 0.001143296
    %v82 = vmul.f32 %v68, %v81
    %v83 = vadd.f32 %v82, 0.014752088
    %v84 = vmul.f32 %v68, %v83
    %v85 = vadd.f32 %v84, 0.112945676
    %v86 = vmul.f32 %v68, %v85
    %v87 = vadd.f32 %v86, 0.4994258
    %v88 = vmul.f32 %v68, %v87
    %v89 = vadd.f32 %v88, 1.0
    %v90 = vrcp.pop %v89
    %v91 = vmul.f32 %v89, %v90
    %v92 = vsub.f32 1.0, %v91
    %v93 = vmul.f32 %v90, %v92
    %v94 = vadd.f32 %v90, %v93
    %vm95 = vweird.f32 %v89
    %vm96 = vweird.f32 %v90
    %vm97 = vmor %vm95, %vm96
    %v98 = vsel %vm97, %v90, %v94
    %v99 = vand.u32 2147483647, %v89
    %vm100 = vcmp.eq.f32.partialorder %v99, 8.507059e+37
    %v101 = vand.u32 %v89, 2147483648
    %v102 = vor.u32 1.1754944e-38, %v101
    %v103 = vsel %vm100, %v102, %v98
    %v104 = vmul.f32 %v79, %v103
    %v105 = vmin.f32 %v104, 1.0
    %v106 = vmax.f32 %v105, -1.0
    %v107 = vmul.f32 %v66, %v66
    %v108 = vmin.f32 16.0, %v107
    %v109 = vmul.f32 %v108, 2.1237322e-06
    %v110 = vadd.f32 %v109, 0.00028619796
    %v111 = vmul.f32 %v108, %v110
    %v112 = vadd.f32 %v111, 0.0036580483
    %v113 = vmul.f32 %v108, %v112
    %v114 = vadd.f32 %v113, 0.05243302
    %v115 = vmul.f32 %v108, %v114
    %v116 = vadd.f32 %v115, 0.18741608
    %v117 = vmul.f32 %v108, %v116
    %v118 = vadd.f32 %v117, 1.1283791
    %v119 = vmul.f32 %v66, %v118
    %v120 = vmul.f32 %v108, 3.8918573e-05
    %v121 = vadd.f32 %v120, 0.001143296
    %v122 = vmul.f32 %v108, %v121
    %v123 = vadd.f32 %v122, 0.014752088
    %v124 = vmul.f32 %v108, %v123
    %v125 = vadd.f32 %v124, 0.112945676
    %v126 = vmul.f32 %v108, %v125
    %v127 = vadd.f32 %v126, 0.4994258
    %v128 = vmul.f32 %v108, %v127
    %v129 = vadd.f32 %v128, 1.0
    %v130 = vrcp.pop %v129
    %v131 = vmul.f32 %v129, %v130
    %v132 = vsub.f32 1.0, %v131
    %v133 = vmul.f32 %v130, %v132
    %v134 = vadd.f32 %v130, %v133
    %vm135 = vweird.f32 %v129
    %vm136 = vweird.f32 %v130
    %vm137 = vmor %vm135, %vm136
    %v138 = vsel %vm137, %v130, %v134
    %v139 = vand.u32 2147483647, %v129
    %vm140 = vcmp.eq.f32.partialorder %v139, 8.507059e+37
    %v141 = vand.u32 %v129, 2147483648
    %v142 = vor.u32 1.1754944e-38, %v141
    %v143 = vsel %vm140, %v142, %v138
    %v144 = vmul.f32 %v119, %v143
    %v145 = vmin.f32 %v144, 1.0
    %v146 = vmax.f32 %v145, -1.0
    %v147 = vadd.f32 %v106, 1.0
    %v148 = vadd.f32 %v146, 1.0
    %v149 = vmul.f32 %v63, %v147
    %v150 = vmul.f32 %v64, %v148
    %v151 = vld [vmem:[%s3] sm:$0xff]
    %v152 = vld [vmem:[%s3 + $0x8] sm:$0xff]
    %v153 = vld [vmem:[%s3 + $0x10] sm:$0xff]
    %v154 = vld [vmem:[%s3 + $0x18] sm:$0xff]
    %v155 = vld [vmem:[%s3 + $0x20] sm:$0xf]
    %v156 = vld [vmem:[%s4] sm:$0x1]
    %v158 = vperm.slane %v156, 0
    %vm160 = vcmask 293888
    %v162 = vsel %vm160, %v149, 0
    %v165 = vsel %vm160, %v150, 0
    %v168 = vsel %vm36, %v155, 0
    %170 = vmatpush.msra.mxu0 0.0
    %171 = vmatpush.msra.mxu0 0.0
    %172 = vmatpush.msra.mxu0 0.0
    %173 = vmatpush.msra.mxu0 0.0
    %174 = vmatpush.msra.mxu0 0.0
    %175 = vmatpush.msra.mxu0 0.0
    %176 = vmatpush.msra.mxu0 0.0
    %177 = vmatpush.msra.mxu0 0.0
    %178 = vmatpush.msra.mxu0 0.0
    %179 = vmatpush.msra.mxu0 0.0
    %180 = vmatpush.msra.mxu0 0.0
    %181 = vmatpush.msra.mxu0 %v168
    %182 = vmatpush.msra.mxu0 %v154
    %183 = vmatpush.msra.mxu0 %v153
    %184 = vmatpush.msra.mxu0 %v152
    %185 = vmatpush.msra.mxu0 %v151
    %186 = vmatmul.f32.gmra.mxu0 %v162
    %v187 = vpop.f32.mrf.mxu0
    %v188 = vadd.f32 %v158, %v187
    %189 = vmatmul.f32.gmra.mxu0 %v165
    %v190 = vpop.f32.mrf.mxu0
    %v191 = vadd.f32 %v158, %v190
    %192 = vdwg.mxu0
    %193 = vst.msk [vmem:[#allocation2] sm:$0xff] %vm29, %v188
    %194 = vst.msk [vmem:[#allocation2 + $0x8] sm:$0xff] %vm29, %v191
    // Predicated region
    $region22: #{tpu_custom_call.1} parent=1 // pred_check
      _
    $region23: #{tpu_custom_call.1} parent=1 // pred_check_branch
      %196 = sbr.rel (0) target = $region25
    $region24: #{tpu_custom_call.1} parent=1 // pred_region
      %198 = vsyncadd [#allocation3], 0
      %s199 = sshll.u32 [#allocation2], 4
      %s200 = int_to_ptr.vmem [resolvable:$true] %s199
      %s201 = sshll.u32 %s5, 4
      %s202 = int_to_ptr.hbm [resolvable:$true] %s201
      %207 = dma.vmem_to_hbm [thread:$0]  %s200, 256, %s202, [#allocation3], 128, 128, 8
    $region25: #{tpu_custom_call.1} parent=1 // pred_fallthru
      _
    // Predicated region
    $region26: #{tpu_custom_call.1} parent=1 // pred_check
      _
    $region27: #{tpu_custom_call.1} parent=1 // pred_check_branch
      %209 = sbr.rel (0) target = $region29
    $region28: #{tpu_custom_call.1} parent=1 // pred_region
      %211 = dma.done [#allocation3], 256
    $region29: #{tpu_custom_call.1} parent=1 // pred_fallthru
      _
    %212 = vsyncpa [#allocation3], 1

</llo_original>
